<compile_context>
chip_gen: v7x
topology: tpu7x:2x2x1
jax: 0.10.0
libtpu: 0.0.40
codegen_flags: <defaults>
</compile_context>

<pallas_src>
import functools

import numpy as np
import jax
import jax.numpy as jnp
from jax import lax
from jax.experimental import pallas as pl
from jax.experimental.pallas import tpu as pltpu
from jax.scipy.special import gammaln


_F32_TINY = float(jnp.finfo(jnp.float32).tiny)
_MU_CLAMP = 1.0e7
_LANE = 128

# Lanczos (g=7, n=9) coefficients for log-gamma, positive arguments only.
_LANCZOS_G = 7.0
_HALF_LOG_2PI = 0.9189385332046727
_LANCZOS_COEF = (
    0.99999999999980993, 676.5203681218851, -1259.1392167224028,
    771.32342877765313, -176.61502916214059, 12.507343278686905,
    -0.13857109526572012, 9.9843695780195716e-6, 1.5056327351493116e-7)
# Clamp for the rational-series argument so Q(z) ~ z^8 never overflows f32;
# for z >= this the series is ~1 + O(1/z) and the clamp error is negligible.
_SERIES_Z_MAX = 16384.0


def _lanczos_rational_coeffs():
    """Expand c0 + sum_k c_k/(z+k) into P(z)/Q(z), coefficients in f64."""
    c = _LANCZOS_COEF
    q = np.array([1.0])
    for k in range(1, 9):
        q = np.convolve(q, np.array([1.0, float(k)]))          # * (z + k)
    p = c[0] * q                                                # degree 8
    for k in range(1, 9):
        pk = np.array([1.0])
        for j in range(1, 9):
            if j != k:
                pk = np.convolve(pk, np.array([1.0, float(j)]))  # degree 7
        p = p + np.concatenate([[0.0], c[k] * pk])
    return (tuple(float(v) for v in p), tuple(float(v) for v in q))


_LANCZOS_P, _LANCZOS_Q = _lanczos_rational_coeffs()


def _horner(z, coeffs):
    acc = jnp.full_like(z, coeffs[0])
    for c in coeffs[1:]:
        acc = acc * z + c
    return acc


def _nb_nll_elements(y2, t):
    """Per-element NB NLL.

    y2: (2, tm) f32 linear-head outputs [mu_lin ; log_theta_lin]
    t : (1, tm) f32 counts
    returns (1, tm) f32 loss.
    """
    ex = jnp.exp(y2)                                    # 1 EUP push, (2, tm)
    mu = jnp.minimum(ex[0:1, :], _MU_CLAMP) + _F32_TINY
    theta = ex[1:2, :]
    log_theta = y2[1:2, :] + _F32_TINY
    t_theta = t + theta

    # Shifted Lanczos: lgamma(x) = lanczos(x + 1) - log(x), with z := x.
    lg_arg = jnp.concatenate([theta, t_theta], axis=0)  # (2, tm)
    zs = jnp.minimum(lg_arg, _SERIES_Z_MAX)
    series = _horner(zs, _LANCZOS_P) / _horner(zs, _LANCZOS_Q)   # 1 divide
    tt = lg_arg + (_LANCZOS_G + 0.5)
    theta_mu = theta + mu

    # Single (8, tm) log over everything that needs one (full sublane fill).
    logs = jnp.log(jnp.concatenate([tt, series, lg_arg, theta_mu, mu], axis=0))
    lg = (_HALF_LOG_2PI + (lg_arg + 0.5) * logs[0:2, :] - tt
          + logs[2:4, :] - logs[4:6, :])                # (2, tm) lgammas
    log_theta_mu = logs[6:7, :]
    log_mu = logs[7:8, :]

    return (lg[0:1, :] - lg[1:2, :] + t_theta * log_theta_mu
            - theta * log_theta - t * log_mu)


# ----------------------------- kernels ------------------------------------ #

def _nb_reduce_kernel(x_ref, w_ref, b_ref, t_ref, out_ref, acc_ref, *,
                      m_total, tm, steps_per_split, needs_mask):
    split = pl.program_id(0)
    step = pl.program_id(1)

    @pl.when(step == 0)
    def _():
        acc_ref[...] = jnp.zeros_like(acc_ref)

    # (8, tm) = W(8, D) . x_tile(tm, D)^T  (row 0: mu head, row 1: log-theta).
    y = lax.dot_general(w_ref[...], x_ref[...],
                        dimension_numbers=(((1,), (1,)), ((), ())),
                        preferred_element_type=jnp.float32)
    y2 = y[0:2, :] + b_ref[0:2, :]
    loss = _nb_nll_elements(y2, t_ref[...].astype(jnp.float32))    # (1, tm)

    if needs_mask:
        base = (split * steps_per_split + step) * tm
        tile_has_pad = base + tm > m_total

        @pl.when(tile_has_pad)
        def _():
            idx = base + lax.broadcasted_iota(jnp.int32, (1, tm), 1)
            acc_ref[...] += jnp.where(idx < m_total, loss, 0.0)

        @pl.when(jnp.logical_not(tile_has_pad))
        def _():
            acc_ref[...] += loss
    else:
        acc_ref[...] += loss

    @pl.when(step == pl.num_programs(1) - 1)
    def _():
        out_ref[...] = jnp.sum(acc_ref[...]).reshape(1, 1, 1)


def _nb_elementwise_kernel(x_ref, w_ref, b_ref, t_ref, o_ref):
    y = lax.dot_general(w_ref[...], x_ref[...],
                        dimension_numbers=(((1,), (1,)), ((), ())),
                        preferred_element_type=jnp.float32)
    y2 = y[0:2, :] + b_ref[0:2, :]
    o_ref[...] = _nb_nll_elements(y2, t_ref[...].astype(jnp.float32))


# ----------------------------- wrapper ------------------------------------ #

def _round_up(a, b):
    return (a + b - 1) // b * b


def _pick_tm(m_rows, d, itemsize):
    """Row tile targeting a ~2 MiB x tile (cap ~8 MiB), multiple of 128."""
    row_bytes = max(d * itemsize, 1)
    target = (2 * 2**20) // row_bytes
    cap = (8 * 2**20) // row_bytes
    rows = max(512, min(8192, target))
    rows = min(rows, max(_LANE, cap))
    rows = max(_LANE, (rows // _LANE) * _LANE)
    return min(rows, _round_up(m_rows, _LANE))


def _default_num_splits():
    """One partial sum per TensorCore: 2 on v7x (2 TCs/chip), else 1."""
    try:
        kind = jax.devices()[0].device_kind.lower()
    except Exception:
        return 1
    return 2 if ("v7" in kind or "7x" in kind) else 1


@functools.partial(jax.jit, static_argnames=("reduction", "tm", "num_splits"))
def negative_binomial_nll(x, targets, weight, bias, *, reduction="mean",
                          tm=None, num_splits=None):
    """Pallas implementation of NegativeBinomialNLL.forward (default config).

    x:       (..., D) float32 or bfloat16
    targets: (...,)   counts (int or float), same leading shape as x
    weight:  (2, D)   torch nn.Linear(dim, 2).weight layout
    bias:    (2,)
    """
    if reduction not in ("mean", "sum", "none"):
        raise ValueError(f"unknown reduction: {reduction}")

    *lead, D = x.shape
    M = 1
    for s in lead:
        M *= s

    if tm is None:
        tm = _pick_tm(M, D, x.dtype.itemsize)
    tm_eff = min(_round_up(tm, _LANE), _round_up(M, _LANE))
    if num_splits is None:
        num_splits = _default_num_splits()

    x2 = x.reshape(M, D)                 # keep input dtype (no extra HBM pass)
    t1 = targets.reshape(M)

    # Pack the 2-row head into an 8-row, sublane-aligned weight / bias.
    # NOTE: with bf16 activations the head weights are bf16-rounded here
    # (small systematic deviation vs an f32 torch head).
    w8 = jnp.zeros((8, D), x.dtype).at[0:2, :].set(weight.astype(x.dtype))
    b8 = jnp.zeros((8, 1), jnp.float32).at[0:2, 0].set(bias.astype(jnp.float32))

    x_bytes = tm_eff * D * x2.dtype.itemsize
    t_bytes = tm_eff * max(t1.dtype.itemsize, 4)
    # double-buffered inputs + resident weights + accumulator + f32 temporaries
    vmem_est = (2 * (x_bytes + t_bytes) + 2 * (8 * D * x2.dtype.itemsize + 32)
                + tm_eff * 4 + 64 * tm_eff * 4)
    # Cap well below v7x's 64 MiB per-TC VMEM; also fine on v5e/v6e.
    vmem_limit = int(min(48 * 2**20, max(2 * vmem_est, 16 * 2**20)))

    if reduction == "none":
        Mp = _round_up(M, tm_eff)
        if Mp != M:
            x2 = jnp.pad(x2, ((0, Mp - M), (0, 0)))
            t1 = jnp.pad(t1, (0, Mp - M))
        t2 = t1.reshape(1, Mp)
        cost = pl.CostEstimate(
            flops=int(2 * Mp * D * 8 + 120 * Mp),
            transcendentals=int(12 * Mp),
            bytes_accessed=int(x2.size * x2.dtype.itemsize
                               + t2.size * t2.dtype.itemsize
                               + w8.size * w8.dtype.itemsize + Mp * 4))
        out = pl.pallas_call(
            _nb_elementwise_kernel,
            out_shape=jax.ShapeDtypeStruct((1, Mp), jnp.float32),
            grid_spec=pltpu.PrefetchScalarGridSpec(
                num_scalar_prefetch=0,
                grid=(Mp // tm_eff,),
                in_specs=[
                    pl.BlockSpec((tm_eff, D), lambda i: (i, 0)),
                    pl.BlockSpec((8, D), lambda i: (0, 0)),
                    pl.BlockSpec((8, 1), lambda i: (0, 0)),
                    pl.BlockSpec((1, tm_eff), lambda i: (0, i)),
                ],
                out_specs=pl.BlockSpec((1, tm_eff), lambda i: (0, i)),
            ),
            compiler_params=pltpu.CompilerParams(
                dimension_semantics=("parallel",),
                vmem_limit_bytes=vmem_limit),
            cost_estimate=cost,
        )(x2, w8, b8, t2)
        return out[0, :M].reshape(tuple(lead))

    Mp = _round_up(M, tm_eff * num_splits)
    steps_per_split = Mp // (tm_eff * num_splits)
    if Mp != M:
        x2 = jnp.pad(x2, ((0, Mp - M), (0, 0)))
        t1 = jnp.pad(t1, (0, Mp - M))
    t2 = t1.reshape(1, Mp)

    kernel = functools.partial(_nb_reduce_kernel, m_total=M, tm=tm_eff,
                               steps_per_split=steps_per_split,
                               needs_mask=(Mp != M))
    cost = pl.CostEstimate(
        flops=int(2 * Mp * D * 8 + 120 * Mp),
        transcendentals=int(12 * Mp),
        bytes_accessed=int(x2.size * x2.dtype.itemsize
                           + t2.size * t2.dtype.itemsize
                           + w8.size * w8.dtype.itemsize + num_splits * 4))

    x_map = lambda s, i: (s * steps_per_split + i, 0)
    t_map = lambda s, i: (0, s * steps_per_split + i)

    partials = pl.pallas_call(
        kernel,
        out_shape=jax.ShapeDtypeStruct((num_splits, 1, 1), jnp.float32),
        grid_spec=pltpu.PrefetchScalarGridSpec(
            num_scalar_prefetch=0,
            grid=(num_splits, steps_per_split),
            in_specs=[
                pl.BlockSpec((tm_eff, D), x_map),
                pl.BlockSpec((8, D), lambda s, i: (0, 0)),
                pl.BlockSpec((8, 1), lambda s, i: (0, 0)),
                pl.BlockSpec((1, tm_eff), t_map),
            ],
            out_specs=pl.BlockSpec((1, 1, 1), lambda s, i: (s, 0, 0)),
            scratch_shapes=[pltpu.VMEM((1, tm_eff), jnp.float32)],
        ),
        compiler_params=pltpu.CompilerParams(
            dimension_semantics=("parallel", "arbitrary"),
            vmem_limit_bytes=vmem_limit),
        cost_estimate=cost,
    )(x2, w8, b8, t2)

    total = jnp.sum(partials)
    if reduction == "mean":
        return total / jnp.float32(M)
    return total


# ------------------------------- main -------------------------------------- #

if __name__ == "__main__":
    batch, seq, dim = 2, 8, 32

    key = jax.random.PRNGKey(0)
    kx, kt, kw, kb = jax.random.split(key, 4)

    # Round x / weight through bf16 so MXU input rounding is exact and the
    # kernel can be compared tightly against the pure-JAX f32 reference.
    x = jax.random.normal(kx, (batch, seq, dim), jnp.float32)
    x = x.astype(jnp.bfloat16).astype(jnp.float32)
    targets = jax.random.randint(kt, (batch, seq), 0, 100, dtype=jnp.int32)

    bound = 1.0 / float(dim) ** 0.5
    weight = jax.random.uniform(kw, (2, dim), jnp.float32, -bound, bound)
    weight = weight.astype(jnp.bfloat16).astype(jnp.float32)   # torch (C=2, D)
    bias = jax.random.uniform(kb, (2,), jnp.float32, -bound, bound)

    def reference(x, targets, weight, bias, reduction):
        y = jnp.einsum("...d,cd->...c", x, weight,
                       precision=jax.lax.Precision.HIGHEST) + bias
        mus = jnp.minimum(jnp.exp(y[..., 0]), _MU_CLAMP) + _F32_TINY
        log_thetas = y[..., 1] + _F32_TINY
        thetas = jnp.exp(log_thetas)
        t = targets.astype(jnp.float32)
        loss = (gammaln(thetas) - gammaln(t + thetas)
                + t * jnp.log(thetas + mus) - thetas * log_thetas
                - t * jnp.log(mus))
        loss = loss + thetas * jnp.log(thetas + mus)
        if reduction == "mean":
            return jnp.mean(loss)
        if reduction == "sum":
            return jnp.sum(loss)
        return loss

    out_mean = jax.block_until_ready(
        negative_binomial_nll(x, targets, weight, bias, reduction="mean"))
    ref_mean = reference(x, targets, weight, bias, "mean")
    assert jnp.allclose(out_mean, ref_mean, rtol=1e-3, atol=1e-2), (out_mean, ref_mean)

    out_sum = jax.block_until_ready(
        negative_binomial_nll(x, targets, weight, bias, reduction="sum"))
    ref_sum = reference(x, targets, weight, bias, "sum")
    assert jnp.allclose(out_sum, ref_sum, rtol=1e-3, atol=1e-1), (out_sum, ref_sum)

    out_none = jax.block_until_ready(
        negative_binomial_nll(x, targets, weight, bias, reduction="none"))
    ref_none = reference(x, targets, weight, bias, "none")
    assert out_none.shape == (batch, seq)
    assert jnp.allclose(out_none, ref_none, rtol=1e-3, atol=1e-2), (out_none, ref_none)

    print("KERNEL_OK")
</pallas_src>

<mosaic_0001>
module attributes {stable_mosaic.version = 11 : i64} {
  func.func @_nb_reduce_kernel(%arg0: i32, %arg1: i32, %arg2: memref<128x32xf32, #tpu.memory_space<vmem>>, %arg3: memref<8x32xf32, #tpu.memory_space<vmem>>, %arg4: memref<8x1xf32, #tpu.memory_space<vmem>>, %arg5: memref<1x128xi32, #tpu.memory_space<vmem>>, %arg6: memref<1x1x1xf32, #tpu.memory_space<vmem>>, %arg7: memref<1x128xf32, #tpu.memory_space<vmem>>) attributes {dimension_semantics = [#tpu.dimension_semantics<parallel>, #tpu.dimension_semantics<arbitrary>], iteration_bounds = array<i64: 1, 1>, scalar_prefetch = 0 : i64, scratch_operands = 1 : i64, tpu.core_type = #tpu.core_type<tc>, window_params = [{transform_indices = @transform_0, window_bounds = array<i64: 128, 32>}, {pipeline_mode = #tpu.pipeline_mode<synchronous>, transform_indices = @transform_1, window_bounds = array<i64: 8, 32>}, {pipeline_mode = #tpu.pipeline_mode<synchronous>, transform_indices = @transform_2, window_bounds = array<i64: 8, 1>}, {transform_indices = @transform_3, window_bounds = array<i64: 1, 128>}, {transform_indices = @transform_4, window_bounds = array<i64: 1, 1, 1>}]} {
    %c0_i32 = arith.constant 0 : i32
    %0 = arith.cmpi eq, %arg1, %c0_i32 : i32
    %1 = arith.extui %0 : i1 to i32
    %c0_i32_0 = arith.constant 0 : i32
    %2 = arith.cmpi ne, %1, %c0_i32_0 : i32
    scf.if %2 {
      %cst_38 = arith.constant 0.000000e+00 : f32
      %117 = vector.broadcast %cst_38 : f32 to vector<1x128xf32>
      %c0_39 = arith.constant 0 : index
      %c0_40 = arith.constant 0 : index
      %118 = vector.load %arg7[%c0_39, %c0_40] : memref<1x128xf32, #tpu.memory_space<vmem>>, vector<1x128xf32>
      tpu.vector_store %arg7[%c0_39, %c0_40], %117 {strides = array<i32>} : memref<1x128xf32, #tpu.memory_space<vmem>>, vector<1x128xf32>,
    } else {
    }
    %c0 = arith.constant 0 : index
    %c0_1 = arith.constant 0 : index
    %3 = vector.load %arg3[%c0, %c0_1] : memref<8x32xf32, #tpu.memory_space<vmem>>, vector<8x32xf32>
    %c0_2 = arith.constant 0 : index
    %c0_3 = arith.constant 0 : index
    %4 = vector.load %arg2[%c0_2, %c0_3] : memref<128x32xf32, #tpu.memory_space<vmem>>, vector<128x32xf32>
    %cst = arith.constant dense<0.000000e+00> : vector<8x128xf32>
    %5 = tpu.matmul %3, %4, %cst {dimension_numbers = #tpu.dot_dimension_numbers<[1], [1], [0], [0], [0, 0, 1, 0], [], []>} : vector<8x32xf32>, vector<128x32xf32>, vector<8x128xf32> -> vector<8x128xf32>
    %6 = vector.extract_strided_slice %5 {offsets = [0, 0], sizes = [2, 128], strides = [1, 1]} : vector<8x128xf32> to vector<2x128xf32>
    %c0_4 = arith.constant 0 : index
    %c0_5 = arith.constant 0 : index
    %7 = vector.load %arg4[%c0_4, %c0_5] : memref<8x1xf32, #tpu.memory_space<vmem>>, vector<2x1xf32>
    %8 = vector.broadcast %7 : vector<2x1xf32> to vector<2x128xf32>
    %9 = arith.addf %6, %8 : vector<2x128xf32>
    %c0_6 = arith.constant 0 : index
    %c0_7 = arith.constant 0 : index
    %10 = vector.load %arg5[%c0_6, %c0_7] : memref<1x128xi32, #tpu.memory_space<vmem>>, vector<1x128xi32>
    %11 = arith.sitofp %10 : vector<1x128xi32> to vector<1x128xf32>
    %12 = math.exp %9 : vector<2x128xf32>
    %13 = vector.extract_strided_slice %12 {offsets = [0, 0], sizes = [1, 128], strides = [1, 1]} : vector<2x128xf32> to vector<1x128xf32>
    %cst_8 = arith.constant 1.000000e+07 : f32
    %14 = vector.broadcast %cst_8 : f32 to vector<1x128xf32>
    %15 = arith.minimumf %13, %14 : vector<1x128xf32>
    %cst_9 = arith.constant 1.17549435E-38 : f32
    %16 = vector.broadcast %cst_9 : f32 to vector<1x128xf32>
    %17 = arith.addf %15, %16 : vector<1x128xf32>
    %18 = vector.extract_strided_slice %12 {offsets = [1, 0], sizes = [1, 128], strides = [1, 1]} : vector<2x128xf32> to vector<1x128xf32>
    %19 = vector.extract_strided_slice %9 {offsets = [1, 0], sizes = [1, 128], strides = [1, 1]} : vector<2x128xf32> to vector<1x128xf32>
    %cst_10 = arith.constant 1.17549435E-38 : f32
    %20 = vector.broadcast %cst_10 : f32 to vector<1x128xf32>
    %21 = arith.addf %19, %20 : vector<1x128xf32>
    %22 = arith.addf %11, %18 : vector<1x128xf32>
    %23 = tpu.concatenate %18, %22 in 0 : vector<1x128xf32>, vector<1x128xf32> -> vector<2x128xf32>
    %cst_11 = arith.constant 1.638400e+04 : f32
    %24 = vector.broadcast %cst_11 : f32 to vector<2x128xf32>
    %25 = arith.minimumf %23, %24 : vector<2x128xf32>
    %cst_12 = arith.constant 1.000000e+00 : f32
    %26 = vector.broadcast %cst_12 : f32 to vector<2x128xf32>
    %27 = arith.mulf %26, %25 : vector<2x128xf32>
    %cst_13 = arith.constant 60.4583321 : f32
    %28 = vector.broadcast %cst_13 : f32 to vector<2x128xf32>
    %29 = arith.addf %27, %28 : vector<2x128xf32>
    %30 = arith.mulf %29, %25 : vector<2x128xf32>
    %cst_14 = arith.constant 1599.04248 : f32
    %31 = vector.broadcast %cst_14 : f32 to vector<2x128xf32>
    %32 = arith.addf %30, %31 : vector<2x128xf32>
    %33 = arith.mulf %32, %25 : vector<2x128xf32>
    %cst_15 = arith.constant 24165.5098 : f32
    %34 = vector.broadcast %cst_15 : f32 to vector<2x128xf32>
    %35 = arith.addf %33, %34 : vector<2x128xf32>
    %36 = arith.mulf %35, %25 : vector<2x128xf32>
    %cst_16 = arith.constant 228235.219 : f32
    %37 = vector.broadcast %cst_16 : f32 to vector<2x128xf32>
    %38 = arith.addf %36, %37 : vector<2x128xf32>
    %39 = arith.mulf %38, %25 : vector<2x128xf32>
    %cst_17 = arith.constant 1379496.25 : f32
    %40 = vector.broadcast %cst_17 : f32 to vector<2x128xf32>
    %41 = arith.addf %39, %40 : vector<2x128xf32>
    %42 = arith.mulf %41, %25 : vector<2x128xf32>
    %cst_18 = arith.constant 0x4A9F05EA : f32
    %43 = vector.broadcast %cst_18 : f32 to vector<2x128xf32>
    %44 = arith.addf %42, %43 : vector<2x128xf32>
    %45 = arith.mulf %44, %25 : vector<2x128xf32>
    %cst_19 = arith.constant 0x4B2B9D51 : f32
    %46 = vector.broadcast %cst_19 : f32 to vector<2x128xf32>
    %47 = arith.addf %45, %46 : vector<2x128xf32>
    %48 = arith.mulf %47, %25 : vector<2x128xf32>
    %cst_20 = arith.constant 0x4B220ADA : f32
    %49 = vector.broadcast %cst_20 : f32 to vector<2x128xf32>
    %50 = arith.addf %48, %49 : vector<2x128xf32>
    %cst_21 = arith.constant 1.000000e+00 : f32
    %51 = vector.broadcast %cst_21 : f32 to vector<2x128xf32>
    %52 = arith.mulf %51, %25 : vector<2x128xf32>
    %cst_22 = arith.constant 3.600000e+01 : f32
    %53 = vector.broadcast %cst_22 : f32 to vector<2x128xf32>
    %54 = arith.addf %52, %53 : vector<2x128xf32>
    %55 = arith.mulf %54, %25 : vector<2x128xf32>
    %cst_23 = arith.constant 5.460000e+02 : f32
    %56 = vector.broadcast %cst_23 : f32 to vector<2x128xf32>
    %57 = arith.addf %55, %56 : vector<2x128xf32>
    %58 = arith.mulf %57, %25 : vector<2x128xf32>
    %cst_24 = arith.constant 4.536000e+03 : f32
    %59 = vector.broadcast %cst_24 : f32 to vector<2x128xf32>
    %60 = arith.addf %58, %59 : vector<2x128xf32>
    %61 = arith.mulf %60, %25 : vector<2x128xf32>
    %cst_25 = arith.constant 2.244900e+04 : f32
    %62 = vector.broadcast %cst_25 : f32 to vector<2x128xf32>
    %63 = arith.addf %61, %62 : vector<2x128xf32>
    %64 = arith.mulf %63, %25 : vector<2x128xf32>
    %cst_26 = arith.constant 6.728400e+04 : f32
    %65 = vector.broadcast %cst_26 : f32 to vector<2x128xf32>
    %66 = arith.addf %64, %65 : vector<2x128xf32>
    %67 = arith.mulf %66, %25 : vector<2x128xf32>
    %cst_27 = arith.constant 1.181240e+05 : f32
    %68 = vector.broadcast %cst_27 : f32 to vector<2x128xf32>
    %69 = arith.addf %67, %68 : vector<2x128xf32>
    %70 = arith.mulf %69, %25 : vector<2x128xf32>
    %cst_28 = arith.constant 1.095840e+05 : f32
    %71 = vector.broadcast %cst_28 : f32 to vector<2x128xf32>
    %72 = arith.addf %70, %71 : vector<2x128xf32>
    %73 = arith.mulf %72, %25 : vector<2x128xf32>
    %cst_29 = arith.constant 4.032000e+04 : f32
    %74 = vector.broadcast %cst_29 : f32 to vector<2x128xf32>
    %75 = arith.addf %73, %74 : vector<2x128xf32>
    %76 = arith.divf %50, %75 : vector<2x128xf32>
    %cst_30 = arith.constant 7.500000e+00 : f32
    %77 = vector.broadcast %cst_30 : f32 to vector<2x128xf32>
    %78 = arith.addf %23, %77 : vector<2x128xf32>
    %79 = arith.addf %18, %17 : vector<1x128xf32>
    %80 = tpu.concatenate %78, %76, %23, %79, %17 in 0 : vector<2x128xf32>, vector<2x128xf32>, vector<2x128xf32>, vector<1x128xf32>, vector<1x128xf32> -> vector<8x128xf32>
    %81 = math.log %80 : vector<8x128xf32>
    %cst_31 = arith.constant 5.000000e-01 : f32
    %82 = vector.broadcast %cst_31 : f32 to vector<2x128xf32>
    %83 = arith.addf %23, %82 : vector<2x128xf32>
    %84 = vector.extract_strided_slice %81 {offsets = [0, 0], sizes = [2, 128], strides = [1, 1]} : vector<8x128xf32> to vector<2x128xf32>
    %85 = arith.mulf %83, %84 : vector<2x128xf32>
    %cst_32 = arith.constant 0.918938517 : f32
    %86 = vector.broadcast %cst_32 : f32 to vector<2x128xf32>
    %87 = arith.addf %86, %85 : vector<2x128xf32>
    %88 = arith.subf %87, %78 : vector<2x128xf32>
    %89 = vector.extract_strided_slice %81 {offsets = [2, 0], sizes = [2, 128], strides = [1, 1]} : vector<8x128xf32> to vector<2x128xf32>
    %90 = arith.addf %88, %89 : vector<2x128xf32>
    %91 = vector.extract_strided_slice %81 {offsets = [4, 0], sizes = [2, 128], strides = [1, 1]} : vector<8x128xf32> to vector<2x128xf32>
    %92 = arith.subf %90, %91 : vector<2x128xf32>
    %93 = vector.extract_strided_slice %81 {offsets = [6, 0], sizes = [1, 128], strides = [1, 1]} : vector<8x128xf32> to vector<1x128xf32>
    %94 = vector.extract_strided_slice %81 {offsets = [7, 0], sizes = [1, 128], strides = [1, 1]} : vector<8x128xf32> to vector<1x128xf32>
    %95 = vector.extract_strided_slice %92 {offsets = [0, 0], sizes = [1, 128], strides = [1, 1]} : vector<2x128xf32> to vector<1x128xf32>
    %96 = vector.extract_strided_slice %92 {offsets = [1, 0], sizes = [1, 128], strides = [1, 1]} : vector<2x128xf32> to vector<1x128xf32>
    %97 = arith.subf %95, %96 : vector<1x128xf32>
    %98 = arith.mulf %22, %93 : vector<1x128xf32>
    %99 = arith.addf %97, %98 : vector<1x128xf32>
    %100 = arith.mulf %18, %21 : vector<1x128xf32>
    %101 = arith.subf %99, %100 : vector<1x128xf32>
    %102 = arith.mulf %11, %94 : vector<1x128xf32>
    %103 = arith.subf %101, %102 : vector<1x128xf32>
    %c1_i32 = arith.constant 1 : i32
    %104 = arith.muli %arg0, %c1_i32 : i32
    %105 = arith.addi %104, %arg1 : i32
    %c128_i32 = arith.constant 128 : i32
    %106 = arith.muli %105, %c128_i32 : i32
    %c128_i32_33 = arith.constant 128 : i32
    %107 = arith.addi %106, %c128_i32_33 : i32
    %c16_i32 = arith.constant 16 : i32
    %108 = arith.cmpi sgt, %107, %c16_i32 : i32
    %109 = arith.extui %108 : i1 to i32
    %c0_i32_34 = arith.constant 0 : i32
    %110 = arith.cmpi ne, %109, %c0_i32_34 : i32
    scf.if %110 {
      %117 = tpu.iota {dimensions = array<i32: 1>} : vector<1x128xi32>
      %118 = vector.broadcast %106 : i32 to vector<1x128xi32>
      %119 = arith.addi %118, %117 : vector<1x128xi32>
      %c0_38 = arith.constant 0 : index
      %c0_39 = arith.constant 0 : index
      %120 = vector.load %arg7[%c0_38, %c0_39] : memref<1x128xf32, #tpu.memory_space<vmem>>, vector<1x128xf32>
      %c16_i32_40 = arith.constant 16 : i32
      %121 = vector.broadcast %c16_i32_40 : i32 to vector<1x128xi32>
      %122 = arith.cmpi slt, %119, %121 : vector<1x128xi32>
      %cst_41 = arith.constant 0.000000e+00 : f32
      %123 = vector.broadcast %cst_41 : f32 to vector<1x128xf32>
      %124 = arith.select %122, %103, %123 : vector<1x128xi1>, vector<1x128xf32>
      %125 = arith.addf %120, %124 : vector<1x128xf32>
      %c0_42 = arith.constant 0 : index
      %c0_43 = arith.constant 0 : index
      %126 = vector.load %arg7[%c0_42, %c0_43] : memref<1x128xf32, #tpu.memory_space<vmem>>, vector<1x128xf32>
      tpu.vector_store %arg7[%c0_42, %c0_43], %125 {strides = array<i32>} : memref<1x128xf32, #tpu.memory_space<vmem>>, vector<1x128xf32>,
    } else {
    }
    %true = arith.constant true
    %111 = arith.xori %108, %true : i1
    %112 = arith.extui %111 : i1 to i32
    %c0_i32_35 = arith.constant 0 : i32
    %113 = arith.cmpi ne, %112, %c0_i32_35 : i32
    scf.if %113 {
      %c0_38 = arith.constant 0 : index
      %c0_39 = arith.constant 0 : index
      %117 = vector.load %arg7[%c0_38, %c0_39] : memref<1x128xf32, #tpu.memory_space<vmem>>, vector<1x128xf32>
      %118 = arith.addf %117, %103 : vector<1x128xf32>
      %c0_40 = arith.constant 0 : index
      %c0_41 = arith.constant 0 : index
      %119 = vector.load %arg7[%c0_40, %c0_41] : memref<1x128xf32, #tpu.memory_space<vmem>>, vector<1x128xf32>
      tpu.vector_store %arg7[%c0_40, %c0_41], %118 {strides = array<i32>} : memref<1x128xf32, #tpu.memory_space<vmem>>, vector<1x128xf32>,
    } else {
    }
    %c0_i32_36 = arith.constant 0 : i32
    %114 = arith.cmpi eq, %arg1, %c0_i32_36 : i32
    %115 = arith.extui %114 : i1 to i32
    %c0_i32_37 = arith.constant 0 : i32
    %116 = arith.cmpi ne, %115, %c0_i32_37 : i32
    scf.if %116 {
      %c0_38 = arith.constant 0 : index
      %c0_39 = arith.constant 0 : index
      %117 = vector.load %arg7[%c0_38, %c0_39] : memref<1x128xf32, #tpu.memory_space<vmem>>, vector<1x128xf32>
      %118 = vector.shape_cast %117 : vector<1x128xf32> to vector<1x1x128xf32>
      %cst_40 = arith.constant dense<0.000000e+00> : vector<1xf32>
      %119 = vector.multi_reduction <add>, %118, %cst_40 [1, 2] : vector<1x1x128xf32> to vector<1xf32>
      %120 = vector.shape_cast %119 : vector<1xf32> to vector<1x1x1xf32>
      %121 = vector.extract %120[0, 0, 0] : f32 from vector<1x1x1xf32>
      %122 = vector.broadcast %121 : f32 to vector<1x1x1xf32>
      %c0_41 = arith.constant 0 : index
      %c0_42 = arith.constant 0 : index
      %c0_43 = arith.constant 0 : index
      %123 = vector.load %arg6[%c0_41, %c0_42, %c0_43] : memref<1x1x1xf32, #tpu.memory_space<vmem>>, vector<1x1x1xf32>
      tpu.vector_store %arg6[%c0_41, %c0_42, %c0_43], %122 {strides = array<i32>} : memref<1x1x1xf32, #tpu.memory_space<vmem>>, vector<1x1x1xf32>,
    } else {
    }
    return
  }
  func.func @transform_0(%arg0: i32, %arg1: i32) -> (i32, i32) {
    %c1_i32 = arith.constant 1 : i32
    %0 = arith.muli %arg0, %c1_i32 : i32
    %1 = arith.addi %0, %arg1 : i32
    %c0_i32 = arith.constant 0 : i32
    %c0_i32_0 = arith.constant 0 : i32
    return %1, %c0_i32 : i32, i32
  }
  func.func @transform_1(%arg0: i32, %arg1: i32) -> (i32, i32) {
    %c0_i32 = arith.constant 0 : i32
    %c0_i32_0 = arith.constant 0 : i32
    %c0_i32_1 = arith.constant 0 : i32
    return %c0_i32, %c0_i32_0 : i32, i32
  }
  func.func @transform_2(%arg0: i32, %arg1: i32) -> (i32, i32) {
    %c0_i32 = arith.constant 0 : i32
    %c0_i32_0 = arith.constant 0 : i32
    %c0_i32_1 = arith.constant 0 : i32
    return %c0_i32, %c0_i32_0 : i32, i32
  }
  func.func @transform_3(%arg0: i32, %arg1: i32) -> (i32, i32) {
    %c1_i32 = arith.constant 1 : i32
    %0 = arith.muli %arg0, %c1_i32 : i32
    %1 = arith.addi %0, %arg1 : i32
    %c0_i32 = arith.constant 0 : i32
    %c0_i32_0 = arith.constant 0 : i32
    return %c0_i32, %1 : i32, i32
  }
  func.func @transform_4(%arg0: i32, %arg1: i32) -> (i32, i32, i32) {
    %c0_i32 = arith.constant 0 : i32
    %c0_i32_0 = arith.constant 0 : i32
    %c0_i32_1 = arith.constant 0 : i32
    return %arg0, %c0_i32, %c0_i32_0 : i32, i32, i32
  }
}

</mosaic_0001>

<llo_original>
// kernel: negative_binomial_nll.1
$region0: #{negative_binomial_nll.1}
  #allocation0 [shape = 'u32[]', space=smem, size = 0x4, offset = 0x4, fixed_abs, tag = 'smem constant byte address 0x4 - core index']
  #allocation1 [shape = 'u32[144,128]{1,0:T(1,128)}', space=vmem, size = 0x12000, scoped, tag = 'internal scratch']
  #allocation2 [shape = 'f32[1,128]{1,0:T(1,128)}', space=vmem, size = 0x200, scoped, tag = 'scratch operand']
  %s0 = inlined_call_operand.vmem [shape: f32[128,32], index: 0, kind: input, shape index: {}]
  %s1 = inlined_call_operand.vmem [shape: f32[8,32], index: 1, kind: input, shape index: {}]
  %s2 = inlined_call_operand.vmem [shape: f32[8,1], index: 2, kind: input, shape index: {}]
  %s3 = inlined_call_operand.vmem [shape: s32[1,128], index: 3, kind: input, shape index: {}]
  %s4 = inlined_call_operand.hbm [shape: f32[1,1,1], index: 4, kind: output, shape index: {}]
  %s5 = sld [smem:[#allocation0]]
  $region42: #{negative_binomial_nll.1} parent=0
    _
  %s7 = ssub.s32 1, %s5
  %s8 = scalar_select 0, %s7, %s5
  $region1: #{negative_binomial_nll.1} parent=0
    #allocation3 [shape = 'u8[512]{0}', space=vmem, size = 0x400, scoped, tag = 'output window, operand 0, single buffered']
    #allocation4 [shape = 's32[1]{0}', space=sflag, size = 0x4, scoped, tag = 'scoped memory for negative_binomial_nll.1']
    %9 = vsyncpa [#allocation4], 0
    // Predicated region
    $region2: #{negative_binomial_nll.1} parent=1 // pred_check
      _
    $region3: #{negative_binomial_nll.1} parent=1 // pred_check_branch
      %11 = sbr.rel (0) target = $region5
    $region4: #{negative_binomial_nll.1} parent=1 // pred_region
      %s12 = sadd.s32 0, 0
      %s13 = smul.u32 16, %s12
      %p14 = scmp.lt.s32.totalorder %s13, 15
      %s15 = scalar_select %p14, %s13, 15
      %s16 = smul.addr %s15, 8
      %s17 = scalar_lea.vmem %s0, %s16
      %s18 = sadd.s32 0, 0
      %s19 = smul.u32 16, %s18
    $region5: #{negative_binomial_nll.1} parent=1 // pred_fallthru
      _
    // Predicated region
    $region6: #{negative_binomial_nll.1} parent=1 // pred_check
      _
    $region7: #{negative_binomial_nll.1} parent=1 // pred_check_branch
      %21 = sbr.rel (0) target = $region9
    $region8: #{negative_binomial_nll.1} parent=1 // pred_region
      _
    $region9: #{negative_binomial_nll.1} parent=1 // pred_fallthru
      _
    // Predicated region
    $region10: #{negative_binomial_nll.1} parent=1 // pred_check
      _
    $region11: #{negative_binomial_nll.1} parent=1 // pred_check_branch
      %23 = sbr.rel (0) target = $region13
    $region12: #{negative_binomial_nll.1} parent=1 // pred_region
      _
    $region13: #{negative_binomial_nll.1} parent=1 // pred_fallthru
      _
    // Predicated region
    $region14: #{negative_binomial_nll.1} parent=1 // pred_check
      _
    $region15: #{negative_binomial_nll.1} parent=1 // pred_check_branch
      %25 = sbr.rel (0) target = $region17
    $region16: #{negative_binomial_nll.1} parent=1 // pred_region
      %s26 = sadd.s32 0, 0
      %p27 = scmp.lt.s32.totalorder %s26, 0
      %s28 = scalar_select %p27, %s26, 0
      %s29 = scalar_lea.vmem %s3, %s28
      %s30 = sadd.s32 0, 0
    $region17: #{negative_binomial_nll.1} parent=1 // pred_fallthru
      _
    %s31 = sadd.s32 0, 0
    %s32 = smul.u32 16, %s31
    %p33 = scmp.lt.s32.totalorder %s32, 15
    %s34 = scalar_select %p33, %s32, 15
    %s35 = smul.addr %s34, 8
    %s36 = scalar_lea.vmem %s0, %s35
    %s37 = sadd.s32 0, 0
    %p38 = scmp.lt.s32.totalorder %s37, 0
    %s39 = scalar_select %p38, %s37, 0
    %s40 = scalar_lea.vmem %s3, %s39
    %s41 = sadd.s32 0, 0
    %s42 = smul.u32 16, %s41
    %p43 = scmp.lt.s32.totalorder %s42, 15
    %s44 = scalar_select %p43, %s42, 15
    %s45 = smul.addr %s44, 8
    %s46 = scalar_lea.vmem %s0, %s45
    %s47 = sadd.s32 0, 0
    %s48 = smul.u32 16, %s47
    %s49 = sadd.s32 0, 0
    %p50 = scmp.lt.s32.totalorder %s49, 0
    %s51 = scalar_select %p50, %s49, 0
    %s52 = scalar_lea.vmem %s3, %s51
    %s53 = sadd.s32 0, 0
    %p54 = scmp.eq.s32.totalorder 0, 0
    // Predicated region
    $region18: #{negative_binomial_nll.1} parent=1 // pred_check
      %p55 = pneg %p54
    $region19: #{negative_binomial_nll.1} parent=1 // pred_check_branch
      %57 = sbr.rel (%p55) target = $region21
    $region20: #{negative_binomial_nll.1} parent=1 // pred_region
      %58 = vst [vmem:[#allocation2] sm:$0x1] 0.0
    $region21: #{negative_binomial_nll.1} parent=1 // pred_fallthru
      _
    %v59 = vld [vmem:[%s1] sm:$0xff]
    %v60 = vld [vmem:[%s46] sm:$0xff]
    %v61 = vld [vmem:[%s46 + $0x8] sm:$0xff]
    %v62 = vld [vmem:[%s46 + $0x10] sm:$0xff]
    %v63 = vld [vmem:[%s46 + $0x18] sm:$0xff]
    %v64 = vld [vmem:[%s46 + $0x20] sm:$0xff]
    %v65 = vld [vmem:[%s46 + $0x28] sm:$0xff]
    %v66 = vld [vmem:[%s46 + $0x30] sm:$0xff]
    %v67 = vld [vmem:[%s46 + $0x38] sm:$0xff]
    %v68 = vld [vmem:[%s46 + $0x40] sm:$0xff]
    %v69 = vld [vmem:[%s46 + $0x48] sm:$0xff]
    %v70 = vld [vmem:[%s46 + $0x50] sm:$0xff]
    %v71 = vld [vmem:[%s46 + $0x58] sm:$0xff]
    %v72 = vld [vmem:[%s46 + $0x60] sm:$0xff]
    %v73 = vld [vmem:[%s46 + $0x68] sm:$0xff]
    %v74 = vld [vmem:[%s46 + $0x70] sm:$0xff]
    %v75 = vld [vmem:[%s46 + $0x78] sm:$0xff]
    %vm76 = vcmask 261120
    %v78 = vsel %vm76, %v59, 0
    %v81 = vsel %vm76, %v60, 0
    %v84 = vsel %vm76, %v61, 0
    %v87 = vsel %vm76, %v62, 0
    %v90 = vsel %vm76, %v63, 0
    %v93 = vsel %vm76, %v64, 0
    %v96 = vsel %vm76, %v65, 0
    %v99 = vsel %vm76, %v66, 0
    %v102 = vsel %vm76, %v67, 0
    %v105 = vsel %vm76, %v68, 0
    %v108 = vsel %vm76, %v69, 0
    %v111 = vsel %vm76, %v70, 0
    %v114 = vsel %vm76, %v71, 0
    %v117 = vsel %vm76, %v72, 0
    %v120 = vsel %vm76, %v73, 0
    %v123 = vsel %vm76, %v74, 0
    %v126 = vsel %vm76, %v75, 0
    %128 = vmatprep.subr.mxu0 0.0
    %129 = vmatpush1.xpose.msra.mxu0 %v81
    %130 = vmatprep.subr.mxu0 0.0
    %131 = vmatpush1.xpose.msra.mxu0 %v84
    %132 = vmatprep.subr.mxu0 0.0
    %133 = vmatpush1.xpose.msra.mxu0 %v87
    %134 = vmatprep.subr.mxu0 0.0
    %135 = vmatpush1.xpose.msra.mxu0 %v90
    %136 = vmatprep.subr.mxu0 0.0
    %137 = vmatpush1.xpose.msra.mxu0 %v93
    %138 = vmatprep.subr.mxu0 0.0
    %139 = vmatpush1.xpose.msra.mxu0 %v96
    %140 = vmatprep.subr.mxu0 0.0
    %141 = vmatpush1.xpose.msra.mxu0 %v99
    %142 = vmatprep.subr.mxu0 0.0
    %143 = vmatpush1.xpose.msra.mxu0 %v102
    %144 = vmatprep.subr.mxu0 0.0
    %145 = vmatpush1.xpose.msra.mxu0 %v105
    %146 = vmatprep.subr.mxu0 0.0
    %147 = vmatpush1.xpose.msra.mxu0 %v108
    %148 = vmatprep.subr.mxu0 0.0
    %149 = vmatpush1.xpose.msra.mxu0 %v111
    %150 = vmatprep.subr.mxu0 0.0
    %151 = vmatpush1.xpose.msra.mxu0 %v114
    %152 = vmatprep.subr.mxu0 0.0
    %153 = vmatpush1.xpose.msra.mxu0 %v117
    %154 = vmatprep.subr.mxu0 0.0
    %155 = vmatpush1.xpose.msra.mxu0 %v120
    %156 = vmatprep.subr.mxu0 0.0
    %157 = vmatpush1.xpose.msra.mxu0 %v123
    %158 = vmatprep.subr.mxu0 0.0
    %159 = vmatpush1.xpose.msra.mxu0 %v126
    %160 = vmatprep.subr.mxu0 0.0
    %161 = vmatpush1.xpose.msra.mxu0 0.0
    %162 = vmatprep.subr.mxu0 0.0
    %163 = vmatpush1.xpose.msra.mxu0 0.0
    %164 = vmatprep.subr.mxu0 0.0
    %165 = vmatpush1.xpose.msra.mxu0 0.0
    %166 = vmatprep.subr.mxu0 0.0
    %167 = vmatpush1.xpose.msra.mxu0 0.0
    %168 = vmatprep.subr.mxu0 0.0
    %169 = vmatpush1.xpose.msra.mxu0 0.0
    %170 = vmatprep.subr.mxu0 0.0
    %171 = vmatpush1.xpose.msra.mxu0 0.0
    %172 = vmatprep.subr.mxu0 0.0
    %173 = vmatpush1.xpose.msra.mxu0 0.0
    %174 = vmatprep.subr.mxu0 0.0
    %175 = vmatpush1.xpose.msra.mxu0 0.0
    %176 = vmatprep.subr.mxu0 0.0
    %177 = vmatpush1.xpose.msra.mxu0 0.0
    %178 = vmatprep.subr.mxu0 0.0
    %179 = vmatpush1.xpose.msra.mxu0 0.0
    %180 = vmatprep.subr.mxu0 0.0
    %181 = vmatpush1.xpose.msra.mxu0 0.0
    %182 = vmatprep.subr.mxu0 0.0
    %183 = vmatpush1.xpose.msra.mxu0 0.0
    %184 = vmatprep.subr.mxu0 0.0
    %185 = vmatpush1.xpose.msra.mxu0 0.0
    %186 = vmatprep.subr.mxu0 0.0
    %187 = vmatpush1.xpose.msra.mxu0 0.0
    %188 = vmatprep.subr.mxu0 0.0
    %189 = vmatpush1.xpose.msra.mxu0 0.0
    %190 = vmatprep.subr.mxu0 0.0
    %191 = vmatpush1.xpose.msra.mxu0 0.0
    %192 = vmatprep.mubr.f32.mxu0 0.0
    %193 = vmatmul.mubr.f32.gmra.mrb[0].mxu0 %v78
    %v194 = vpop.f32.mrb[0].mxu0
    %v195 = vadd.f32 0.0, %v194
    %v196 = vpop.f32.mrb[0].mxu0
    %197 = vdwg.mxu0
    %v198 = vld [vmem:[%s2] sm:$0x3]
    %200 = vset.pattern.permute.xlu0 0
    %201 = vperm.xlu0 %200, %v198
    %v202 = vpop.permute.xlu0 %201
    %v204 = vadd.f32 %v195, %v202
    %v205 = vld [vmem:[%s52] sm:$0x1]
    %v206 = vcvt.s32.f32 %v205
    %v207 = vmul.f32 %v204, 1.442695
    %v208 = vpow.pop %v207
    %v209 = vmin.f32 %v208, 10000000.0
    %v210 = vadd.f32 %v209, 1.1754944e-38
    %v211 = vadd.f32 %v204, 1.1754944e-38
    %v214 = vunpack.c.l.s4 1966171168
    %v215 = vunpack.c.0.s8 %v214
    %v216 = vlaneseq
    %v217 = vshrl.u32 %v216, 7
    %v218 = vsub.s32 %v215, %v217
    %v219 = vrot.slane %v208, %v218
    %v220 = vcombine.high %v219, %v219
    %v222 = vunpack.c.l.s4 1966171168
    %v223 = vunpack.c.0.s8 %v222
    %v224 = vlaneseq
    %v225 = vshrl.u32 %v224, 7
    %v226 = vsub.s32 %v223, %v225
    %v227 = vrot.slane %v220, %v226
    %v229 = vadd.f32 %v206, %v227
    %v230 = vrot.slane %v208, 1
    %v233 = vlaneseq
    %v234 = vshrl.u32 %v233, 7
    %v235 = vsub.s32 0, %v234
    %v236 = vrot.slane %v229, %v235
    %vm238 = vcmask 1040384
    %v239 = vsel %vm238, %v230, %v236
    %v240 = vmin.f32 %v239, 16384.0
    %v241 = vadd.f32 %v240, 60.458332
    %v242 = vmul.f32 %v241, %v240
    %v243 = vadd.f32 %v242, 1599.0425
    %v244 = vmul.f32 %v243, %v240
    %v245 = vadd.f32 %v244, 24165.51
    %v246 = vmul.f32 %v245, %v240
    %v247 = vadd.f32 %v246, 228235.22
    %v248 = vmul.f32 %v247, %v240
    %v249 = vadd.f32 %v248, 1379496.3
    %v250 = vmul.f32 %v249, %v240
    %v251 = vadd.f32 %v250, 5210869.0
    %v252 = vmul.f32 %v251, %v240
    %v253 = vadd.f32 %v252, 11246929.0
    %v254 = vmul.f32 %v253, %v240
    %v255 = vadd.f32 %v254, 10619610.0
    %v256 = vadd.f32 %v240, 36.0
    %v257 = vmul.f32 %v256, %v240
    %v258 = vadd.f32 %v257, 546.0
    %v259 = vmul.f32 %v258, %v240
    %v260 = vadd.f32 %v259, 4536.0
    %v261 = vmul.f32 %v260, %v240
    %v262 = vadd.f32 %v261, 22449.0
    %v263 = vmul.f32 %v262, %v240
    %v264 = vadd.f32 %v263, 67284.0
    %v265 = vmul.f32 %v264, %v240
    %v266 = vadd.f32 %v265, 118124.0
    %v267 = vmul.f32 %v266, %v240
    %v268 = vadd.f32 %v267, 109584.0
    %v269 = vmul.f32 %v268, %v240
    %v270 = vadd.f32 %v269, 40320.0
    %v271 = vrcp.pop %v270
    %v272 = vmul.f32 %v255, %v271
    %v273 = vadd.f32 %v239, 7.5
    %v275 = vrot.slane %v210, 7
    %v277 = vadd.f32 %v208, %v275
    %v279 = vrot.slane %v272, 6
    %v282 = vrot.slane %v239, 4
    %v285 = vrot.slane %v277, 3
    %v287 = vrot.slane %v210, 1
    %vm289 = vcmask 1041408
    %v290 = vsel %vm289, %v273, %v279
    %vm291 = vcmask 1043456
    %v292 = vsel %vm291, %v290, %v282
    %vm293 = vcmask 1045504
    %v294 = vsel %vm293, %v292, %v285
    %vm295 = vcmask 1046528
    %v296 = vsel %vm295, %v294, %v287
    %v297 = vlog2.pop %v296
    %v298 = vmul.f32 %v297, 0.6931472
    %v299 = vadd.f32 %v239, 0.5
    %v300 = vmul.f32 %v299, %v298
    %v301 = vadd.f32 %v300, 0.9189385
    %v302 = vsub.f32 %v301, %v273
    %v304 = vrot.slane %v298, 2
    %v306 = vadd.f32 %v302, %v304
    %v307 = vrot.slane %v298, 4
    %v309 = vsub.f32 %v306, %v307
    %v311 = vrot.slane %v309, 1
    %v313 = vsub.f32 %v309, %v311
    %v314 = vcombine.high %v298, %v298
    %v316 = vunpack.c.l.s4 1966171168
    %v317 = vunpack.c.0.s8 %v316
    %v318 = vlaneseq
    %v319 = vshrl.u32 %v318, 7
    %v320 = vsub.s32 %v317, %v319
    %v321 = vrot.slane %v314, %v320
    %v323 = vunpack.c.l.s4 1966171168
    %v324 = vunpack.c.0.s8 %v323
    %v325 = vlaneseq
    %v326 = vshrl.u32 %v325, 7
    %v327 = vsub.s32 %v324, %v326
    %v328 = vrot.slane %v321, %v327
    %v329 = vcombine.high %v328, %v328
    %v331 = vmul.f32 %v229, %v329
    %v332 = vadd.f32 %v313, %v331
    %v333 = vmul.f32 %v208, %v211
    %v335 = vrot.slane %v333, 1
    %v337 = vsub.f32 %v332, %v335
    %v338 = vcombine.high %v321, %v321
    %v340 = vunpack.c.l.s4 1966171168
    %v341 = vunpack.c.0.s8 %v340
    %v342 = vlaneseq
    %v343 = vshrl.u32 %v342, 7
    %v344 = vsub.s32 %v341, %v343
    %v345 = vrot.slane %v338, %v344
    %v346 = vcombine.high %v345, %v345
    %v348 = vmul.f32 %v206, %v346
    %v349 = vsub.f32 %v337, %v348
    %s350 = sadd.s32 0, 0
    %s351 = smul.u32 %s350, 128
    %s352 = sadd.s32 %s351, 128
    %p353 = scmp.gt.s32.totalorder %s352, 16
    // Predicated region
    $region22: #{negative_binomial_nll.1} parent=1 // pred_check
      %p354 = pneg %p353
    $region23: #{negative_binomial_nll.1} parent=1 // pred_check_branch
      %356 = sbr.rel (%p354) target = $region25
    $region24: #{negative_binomial_nll.1} parent=1 // pred_region
      %v357 = vlaneseq
      %v358 = vand.u32 %v357, 127
      %v359 = vstv %s351
      %v360 = vadd.s32 %v359, %v358
      %v361 = vld [vmem:[#allocation2] sm:$0x1]
      %vm362 = vcmp.lt.s32.totalorder %v360, 16
      %v363 = vsel %vm362, %v349, 0.0
      %v364 = vadd.f32 %v361, %v363
      %365 = vst [vmem:[#allocation2] sm:$0x1] %v364
    $region25: #{negative_binomial_nll.1} parent=1 // pred_fallthru
      _
    %p366 = scmp.le.s32.totalorder %s352, 16
    // Predicated region
    $region26: #{negative_binomial_nll.1} parent=1 // pred_check
      %p367 = pneg %p366
    $region27: #{negative_binomial_nll.1} parent=1 // pred_check_branch
      %369 = sbr.rel (%p367) target = $region29
    $region28: #{negative_binomial_nll.1} parent=1 // pred_region
      %v370 = vld [vmem:[#allocation2] sm:$0x1]
      %v371 = vadd.f32 %v370, %v349
      %372 = vst [vmem:[#allocation2] sm:$0x1] %v371
    $region29: #{negative_binomial_nll.1} parent=1 // pred_fallthru
      _
    // Predicated region
    $region30: #{negative_binomial_nll.1} parent=1 // pred_check
      %p373 = pneg %p54
    $region31: #{negative_binomial_nll.1} parent=1 // pred_check_branch
      %375 = sbr.rel (%p373) target = $region33
    $region32: #{negative_binomial_nll.1} parent=1 // pred_region
      %v376 = vld [vmem:[#allocation2] sm:$0x1]
      %v377 = vsel %vm238, %v376, 0.0
      %378 = vadd.xlane.f32.xlu0 %v377
      %v379 = vpop.xlane.xlu0 %378
      %v380 = vrot.slane %v379, 4
      %v381 = vadd.f32 %v379, %v380
      %v382 = vrot.slane %v381, 2
      %v383 = vadd.f32 %v381, %v382
      %v384 = vrot.slane %v383, 1
      %v385 = vadd.f32 %v383, %v384
      %s386 = vtos %v385
      %v387 = vstv %s386
      %vm388 = vcmask 0
      %389 = vst.msk [vmem:[#allocation3] sm:$0x1] %vm388, %v387
    $region33: #{negative_binomial_nll.1} parent=1 // pred_fallthru
      _
    // Predicated region
    $region34: #{negative_binomial_nll.1} parent=1 // pred_check
      _
    $region35: #{negative_binomial_nll.1} parent=1 // pred_check_branch
      %391 = sbr.rel (0) target = $region37
    $region36: #{negative_binomial_nll.1} parent=1 // pred_region
      %s393 = ssub.s32 16, 16
      %394 = vsyncadd [#allocation4], %s393
      %s396 = sshll.u32 [#allocation3], 4
      %s397 = int_to_ptr.vmem [resolvable:$true] %s396
      %399 = dma.vmem_to_hbm [thread:$0]  %s397, 16, %s4, [#allocation4]
    $region37: #{negative_binomial_nll.1} parent=1 // pred_fallthru
      _
    // Predicated region
    $region38: #{negative_binomial_nll.1} parent=1 // pred_check
      _
    $region39: #{negative_binomial_nll.1} parent=1 // pred_check_branch
      %401 = sbr.rel (0) target = $region41
    $region40: #{negative_binomial_nll.1} parent=1 // pred_region
      %402 = dma.done [#allocation4], 16
    $region41: #{negative_binomial_nll.1} parent=1 // pred_fallthru
      _
    %403 = vsyncpa [#allocation4], 1

</llo_original>
